<compile_context>
chip_gen: v7x
topology: tpu7x:2x2x1
jax: 0.10.0
libtpu: 0.0.40
codegen_flags: <defaults>
</compile_context>

<pallas_src>
import jax
import jax.numpy as jnp
from jax.experimental import pallas as pl
from jax.experimental.pallas import tpu as pltpu

INPUT_DIM = 90
OUTPUT_DIM = 10
HIDDEN = 128

K_PAD = 128   # padded input-feature width used inside the kernel
N_PAD = 128   # padded output width (lane-dense, unmasked store)

SELU_ALPHA = 1.6732632423543772
SELU_SCALE = 1.0507009873554805


def _round_up(x, m):
    return ((x + m - 1) // m) * m


def _selu(x):
    # f32 elementwise; exp lowers to the EUP slot (does not compete with the MXU).
    return SELU_SCALE * jnp.where(x > 0.0, x, SELU_ALPHA * (jnp.exp(x) - 1.0))


def mlp_kernel(x_ref,
               w1_ref, b1_ref,
               w2_ref, b2_ref,
               w3_ref, b3_ref,
               w4_ref, b4_ref,
               o_ref,
               xpad_ref):
    # In-kernel pad (90 -> 128 lanes) + bf16 cast of the x tile: two disjoint
    # masked stores into a VMEM scratch, then fully aligned (tb,128)x(128,128)
    # MXU matmuls.  No extra HBM traffic for the padding.
    tb = x_ref.shape[0]
    xpad_ref[:, :INPUT_DIM] = x_ref[...].astype(jnp.bfloat16)
    xpad_ref[:, INPUT_DIM:] = jnp.zeros((tb, K_PAD - INPUT_DIM), jnp.bfloat16)

    h = jnp.dot(xpad_ref[...], w1_ref[...],
                preferred_element_type=jnp.float32) + b1_ref[...]
    h = _selu(h)
    h = jnp.dot(h.astype(jnp.bfloat16), w2_ref[...],
                preferred_element_type=jnp.float32) + b2_ref[...]
    h = _selu(h)
    h = jnp.dot(h.astype(jnp.bfloat16), w3_ref[...],
                preferred_element_type=jnp.float32) + b3_ref[...]
    h = _selu(h)
    h = jnp.dot(h.astype(jnp.bfloat16), w4_ref[...],
                preferred_element_type=jnp.float32) + b4_ref[...]
    o_ref[...] = h.astype(o_ref.dtype)   # bf16, 128-lane unmasked store


def prepare_params(params):
    """One-time weight/bias pad + cast (hoisted out of the per-call path).

    params = [(W1,b1),...,(W4,b4)], Wi shaped (in, out), bi shaped (1, out), f32.
    Returns the flat tuple of kernel-ready operands; cache and reuse it.
    """
    (w1, b1), (w2, b2), (w3, b3), (w4, b4) = params
    w1_p = jnp.zeros((K_PAD, HIDDEN), jnp.bfloat16).at[:INPUT_DIM, :].set(
        w1.astype(jnp.bfloat16))
    w4_p = jnp.zeros((HIDDEN, N_PAD), jnp.bfloat16).at[:, :OUTPUT_DIM].set(
        w4.astype(jnp.bfloat16))
    b4_p = jnp.zeros((1, N_PAD), jnp.float32).at[:, :OUTPUT_DIM].set(
        b4.astype(jnp.float32))
    return (w1_p, b1.astype(jnp.float32),
            w2.astype(jnp.bfloat16), b2.astype(jnp.float32),
            w3.astype(jnp.bfloat16), b3.astype(jnp.float32),
            w4_p, b4_p)


def _choose_batch_tiling(batch, target_block):
    # Large tiles amortize the ~0.35us/grid-step overhead; >=2 steps for
    # moderately large batches so both v7x TensorCores get work.
    nb = pl.cdiv(batch, target_block)
    if batch >= 256:
        nb = max(nb, 2)
    tb = _round_up(pl.cdiv(batch, nb), 8)
    return nb, tb, nb * tb


def model_d_forward(x, prepared, *, target_block=1024):
    """x: (batch, 90) f32; prepared = prepare_params(params). Returns (batch, 10) f32."""
    w1, b1, w2, b2, w3, b3, w4, b4 = prepared
    batch = x.shape[0]
    nb, tb, padded_batch = _choose_batch_tiling(batch, target_block)
    if padded_batch != batch:
        # Only for non-tile-aligned batches; waste is < 8*nb rows.
        x = jnp.pad(x, ((0, padded_batch - batch), (0, 0)))

    def resident(shape):
        # Constant index_map -> operand stays resident in VMEM across the grid.
        return pl.BlockSpec(shape, lambda i: (0, 0))

    flops = 2 * padded_batch * 4 * HIDDEN * K_PAD
    transcendentals = 3 * padded_batch * HIDDEN
    bytes_accessed = (4 * padded_batch * INPUT_DIM            # x in, f32
                      + 2 * padded_batch * N_PAD              # out, bf16
                      + 2 * (w1.size + w2.size + w3.size + w4.size)   # bf16 W
                      + 4 * (b1.size + b2.size + b3.size + b4.size))  # f32 b

    out_padded = pl.pallas_call(
        mlp_kernel,
        out_shape=jax.ShapeDtypeStruct((padded_batch, N_PAD), jnp.bfloat16),
        grid=(nb,),
        in_specs=[
            pl.BlockSpec((tb, INPUT_DIM), lambda i: (i, 0)),  # x tile, pipelined
            resident((K_PAD, HIDDEN)), resident((1, HIDDEN)),
            resident((HIDDEN, HIDDEN)), resident((1, HIDDEN)),
            resident((HIDDEN, HIDDEN)), resident((1, HIDDEN)),
            resident((HIDDEN, N_PAD)), resident((1, N_PAD)),
        ],
        out_specs=pl.BlockSpec((tb, N_PAD), lambda i: (i, 0)),
        scratch_shapes=[pltpu.VMEM((tb, K_PAD), jnp.bfloat16)],
        compiler_params=pltpu.CompilerParams(
            dimension_semantics=("parallel",)),
        cost_estimate=pl.CostEstimate(
            flops=flops,
            transcendentals=transcendentals,
            bytes_accessed=bytes_accessed),
    )(x, w1, b1, w2, b2, w3, b3, w4, b4)

    # Drop batch / lane padding; upcast the 10 real logits to f32 (module semantics).
    return out_padded[:batch, :OUTPUT_DIM].astype(jnp.float32)


def init_params(key):
    """Deterministic init mimicking torch.nn.Linear defaults: U(-1/sqrt(fan_in), +1/sqrt(fan_in))."""
    dims = (INPUT_DIM, HIDDEN, HIDDEN, HIDDEN, OUTPUT_DIM)
    params = []
    for i in range(len(dims) - 1):
        fan_in, fan_out = dims[i], dims[i + 1]
        key, kw, kb = jax.random.split(key, 3)
        bound = 1.0 / jnp.sqrt(fan_in)
        w = jax.random.uniform(kw, (fan_in, fan_out), jnp.float32, -bound, bound)
        b = jax.random.uniform(kb, (1, fan_out), jnp.float32, -bound, bound)
        params.append((w, b))
    return params


def reference_forward(x, params, *, mirror_bf16=False):
    """Pure-JAX reference. mirror_bf16=True applies the same bf16 MXU casts as the kernel."""
    h = x
    if mirror_bf16:
        h = h.astype(jnp.bfloat16)
    for i, (w, b) in enumerate(params):
        if mirror_bf16:
            h = jnp.dot(h.astype(jnp.bfloat16), w.astype(jnp.bfloat16),
                        preferred_element_type=jnp.float32) + b
        else:
            h = h @ w + b
        if i < len(params) - 1:
            h = SELU_SCALE * jnp.where(h > 0.0, h, SELU_ALPHA * (jnp.exp(h) - 1.0))
    return h


if __name__ == "__main__":
    key = jax.random.PRNGKey(0)
    key, kx = jax.random.split(key)

    batch = 8
    x = jax.random.normal(kx, (batch, INPUT_DIM), jnp.float32)

    params = init_params(key)
    prepared = prepare_params(params)   # cached, one-time pad/cast

    out = model_d_forward(x, prepared)
    out = jax.block_until_ready(out)
    assert out.shape == (batch, OUTPUT_DIM)

    # Check against a reference with the same bf16 MXU casts (tolerance covers
    # the bf16 rounding of the kernel's output store).
    ref_bf16 = reference_forward(x, params, mirror_bf16=True)
    assert jnp.allclose(out, ref_bf16, atol=2.5e-2, rtol=2e-2), (
        float(jnp.max(jnp.abs(out - ref_bf16))))

    # Loose check against exact f32 module semantics.
    ref_f32 = reference_forward(x, params)
    assert jnp.allclose(out, ref_f32, atol=8e-2, rtol=8e-2), (
        float(jnp.max(jnp.abs(out - ref_f32))))

    print("KERNEL_OK")
</pallas_src>

<mosaic_0001>
module attributes {stable_mosaic.version = 11 : i64} {
  func.func @mlp_kernel(%arg0: i32, %arg1: memref<8x90xf32, #tpu.memory_space<vmem>>, %arg2: memref<128x128xbf16, #tpu.memory_space<vmem>>, %arg3: memref<1x128xf32, #tpu.memory_space<vmem>>, %arg4: memref<128x128xbf16, #tpu.memory_space<vmem>>, %arg5: memref<1x128xf32, #tpu.memory_space<vmem>>, %arg6: memref<128x128xbf16, #tpu.memory_space<vmem>>, %arg7: memref<1x128xf32, #tpu.memory_space<vmem>>, %arg8: memref<128x128xbf16, #tpu.memory_space<vmem>>, %arg9: memref<1x128xf32, #tpu.memory_space<vmem>>, %arg10: memref<8x128xbf16, #tpu.memory_space<vmem>>, %arg11: memref<8x128xbf16, #tpu.memory_space<vmem>>) attributes {dimension_semantics = [#tpu.dimension_semantics<parallel>], iteration_bounds = array<i64: 1>, scalar_prefetch = 0 : i64, scratch_operands = 1 : i64, tpu.core_type = #tpu.core_type<tc>, window_params = [{transform_indices = @transform_0, window_bounds = array<i64: 8, 90>}, {pipeline_mode = #tpu.pipeline_mode<synchronous>, transform_indices = @transform_1, window_bounds = array<i64: 128, 128>}, {pipeline_mode = #tpu.pipeline_mode<synchronous>, transform_indices = @transform_2, window_bounds = array<i64: 1, 128>}, {pipeline_mode = #tpu.pipeline_mode<synchronous>, transform_indices = @transform_3, window_bounds = array<i64: 128, 128>}, {pipeline_mode = #tpu.pipeline_mode<synchronous>, transform_indices = @transform_4, window_bounds = array<i64: 1, 128>}, {pipeline_mode = #tpu.pipeline_mode<synchronous>, transform_indices = @transform_5, window_bounds = array<i64: 128, 128>}, {pipeline_mode = #tpu.pipeline_mode<synchronous>, transform_indices = @transform_6, window_bounds = array<i64: 1, 128>}, {pipeline_mode = #tpu.pipeline_mode<synchronous>, transform_indices = @transform_7, window_bounds = array<i64: 128, 128>}, {pipeline_mode = #tpu.pipeline_mode<synchronous>, transform_indices = @transform_8, window_bounds = array<i64: 1, 128>}, {transform_indices = @transform_9, window_bounds = array<i64: 8, 128>}]} {
    %c0 = arith.constant 0 : index
    %c0_0 = arith.constant 0 : index
    %0 = vector.load %arg1[%c0, %c0_0] : memref<8x90xf32, #tpu.memory_space<vmem>>, vector<8x90xf32>
    %1 = arith.truncf %0 : vector<8x90xf32> to vector<8x90xbf16>
    %c0_1 = arith.constant 0 : index
    %c0_2 = arith.constant 0 : index
    %2 = vector.load %arg11[%c0_1, %c0_2] : memref<8x128xbf16, #tpu.memory_space<vmem>>, vector<8x90xbf16>
    tpu.vector_store %arg11[%c0_1, %c0_2], %1 {strides = array<i32>} : memref<8x128xbf16, #tpu.memory_space<vmem>>, vector<8x90xbf16>,
    %cst = arith.constant 0.000000e+00 : bf16
    %3 = vector.broadcast %cst : bf16 to vector<8x38xbf16>
    %c0_3 = arith.constant 0 : index
    %c90 = arith.constant 90 : index
    %4 = vector.load %arg11[%c0_3, %c90] : memref<8x128xbf16, #tpu.memory_space<vmem>>, vector<8x38xbf16>
    tpu.vector_store %arg11[%c0_3, %c90], %3 {strides = array<i32>} : memref<8x128xbf16, #tpu.memory_space<vmem>>, vector<8x38xbf16>,
    %c0_4 = arith.constant 0 : index
    %c0_5 = arith.constant 0 : index
    %5 = vector.load %arg11[%c0_4, %c0_5] : memref<8x128xbf16, #tpu.memory_space<vmem>>, vector<8x128xbf16>
    %c0_6 = arith.constant 0 : index
    %c0_7 = arith.constant 0 : index
    %6 = vector.load %arg2[%c0_6, %c0_7] : memref<128x128xbf16, #tpu.memory_space<vmem>>, vector<128x128xbf16>
    %cst_8 = arith.constant dense<0.000000e+00> : vector<8x128xf32>
    %7 = tpu.matmul %5, %6, %cst_8 {dimension_numbers = #tpu.dot_dimension_numbers<[1], [0], [0], [1], [0, 0, 1, 1], [], []>} : vector<8x128xbf16>, vector<128x128xbf16>, vector<8x128xf32> -> vector<8x128xf32>
    %c0_9 = arith.constant 0 : index
    %c0_10 = arith.constant 0 : index
    %8 = vector.load %arg3[%c0_9, %c0_10] : memref<1x128xf32, #tpu.memory_space<vmem>>, vector<1x128xf32>
    %9 = vector.broadcast %8 : vector<1x128xf32> to vector<8x128xf32>
    %10 = arith.addf %7, %9 : vector<8x128xf32>
    %cst_11 = arith.constant 0.000000e+00 : f32
    %11 = vector.broadcast %cst_11 : f32 to vector<8x128xf32>
    %12 = arith.cmpf ogt, %10, %11 : vector<8x128xf32>
    %13 = math.exp %10 : vector<8x128xf32>
    %cst_12 = arith.constant 1.000000e+00 : f32
    %14 = vector.broadcast %cst_12 : f32 to vector<8x128xf32>
    %15 = arith.subf %13, %14 : vector<8x128xf32>
    %cst_13 = arith.constant 1.67326319 : f32
    %16 = vector.broadcast %cst_13 : f32 to vector<8x128xf32>
    %17 = arith.mulf %16, %15 : vector<8x128xf32>
    %18 = arith.select %12, %10, %17 : vector<8x128xi1>, vector<8x128xf32>
    %cst_14 = arith.constant 1.05070102 : f32
    %19 = vector.broadcast %cst_14 : f32 to vector<8x128xf32>
    %20 = arith.mulf %19, %18 : vector<8x128xf32>
    %21 = arith.truncf %20 : vector<8x128xf32> to vector<8x128xbf16>
    %c0_15 = arith.constant 0 : index
    %c0_16 = arith.constant 0 : index
    %22 = vector.load %arg4[%c0_15, %c0_16] : memref<128x128xbf16, #tpu.memory_space<vmem>>, vector<128x128xbf16>
    %cst_17 = arith.constant dense<0.000000e+00> : vector<8x128xf32>
    %23 = tpu.matmul %21, %22, %cst_17 {dimension_numbers = #tpu.dot_dimension_numbers<[1], [0], [0], [1], [0, 0, 1, 1], [], []>} : vector<8x128xbf16>, vector<128x128xbf16>, vector<8x128xf32> -> vector<8x128xf32>
    %c0_18 = arith.constant 0 : index
    %c0_19 = arith.constant 0 : index
    %24 = vector.load %arg5[%c0_18, %c0_19] : memref<1x128xf32, #tpu.memory_space<vmem>>, vector<1x128xf32>
    %25 = vector.broadcast %24 : vector<1x128xf32> to vector<8x128xf32>
    %26 = arith.addf %23, %25 : vector<8x128xf32>
    %cst_20 = arith.constant 0.000000e+00 : f32
    %27 = vector.broadcast %cst_20 : f32 to vector<8x128xf32>
    %28 = arith.cmpf ogt, %26, %27 : vector<8x128xf32>
    %29 = math.exp %26 : vector<8x128xf32>
    %cst_21 = arith.constant 1.000000e+00 : f32
    %30 = vector.broadcast %cst_21 : f32 to vector<8x128xf32>
    %31 = arith.subf %29, %30 : vector<8x128xf32>
    %cst_22 = arith.constant 1.67326319 : f32
    %32 = vector.broadcast %cst_22 : f32 to vector<8x128xf32>
    %33 = arith.mulf %32, %31 : vector<8x128xf32>
    %34 = arith.select %28, %26, %33 : vector<8x128xi1>, vector<8x128xf32>
    %cst_23 = arith.constant 1.05070102 : f32
    %35 = vector.broadcast %cst_23 : f32 to vector<8x128xf32>
    %36 = arith.mulf %35, %34 : vector<8x128xf32>
    %37 = arith.truncf %36 : vector<8x128xf32> to vector<8x128xbf16>
    %c0_24 = arith.constant 0 : index
    %c0_25 = arith.constant 0 : index
    %38 = vector.load %arg6[%c0_24, %c0_25] : memref<128x128xbf16, #tpu.memory_space<vmem>>, vector<128x128xbf16>
    %cst_26 = arith.constant dense<0.000000e+00> : vector<8x128xf32>
    %39 = tpu.matmul %37, %38, %cst_26 {dimension_numbers = #tpu.dot_dimension_numbers<[1], [0], [0], [1], [0, 0, 1, 1], [], []>} : vector<8x128xbf16>, vector<128x128xbf16>, vector<8x128xf32> -> vector<8x128xf32>
    %c0_27 = arith.constant 0 : index
    %c0_28 = arith.constant 0 : index
    %40 = vector.load %arg7[%c0_27, %c0_28] : memref<1x128xf32, #tpu.memory_space<vmem>>, vector<1x128xf32>
    %41 = vector.broadcast %40 : vector<1x128xf32> to vector<8x128xf32>
    %42 = arith.addf %39, %41 : vector<8x128xf32>
    %cst_29 = arith.constant 0.000000e+00 : f32
    %43 = vector.broadcast %cst_29 : f32 to vector<8x128xf32>
    %44 = arith.cmpf ogt, %42, %43 : vector<8x128xf32>
    %45 = math.exp %42 : vector<8x128xf32>
    %cst_30 = arith.constant 1.000000e+00 : f32
    %46 = vector.broadcast %cst_30 : f32 to vector<8x128xf32>
    %47 = arith.subf %45, %46 : vector<8x128xf32>
    %cst_31 = arith.constant 1.67326319 : f32
    %48 = vector.broadcast %cst_31 : f32 to vector<8x128xf32>
    %49 = arith.mulf %48, %47 : vector<8x128xf32>
    %50 = arith.select %44, %42, %49 : vector<8x128xi1>, vector<8x128xf32>
    %cst_32 = arith.constant 1.05070102 : f32
    %51 = vector.broadcast %cst_32 : f32 to vector<8x128xf32>
    %52 = arith.mulf %51, %50 : vector<8x128xf32>
    %53 = arith.truncf %52 : vector<8x128xf32> to vector<8x128xbf16>
    %c0_33 = arith.constant 0 : index
    %c0_34 = arith.constant 0 : index
    %54 = vector.load %arg8[%c0_33, %c0_34] : memref<128x128xbf16, #tpu.memory_space<vmem>>, vector<128x128xbf16>
    %cst_35 = arith.constant dense<0.000000e+00> : vector<8x128xf32>
    %55 = tpu.matmul %53, %54, %cst_35 {dimension_numbers = #tpu.dot_dimension_numbers<[1], [0], [0], [1], [0, 0, 1, 1], [], []>} : vector<8x128xbf16>, vector<128x128xbf16>, vector<8x128xf32> -> vector<8x128xf32>
    %c0_36 = arith.constant 0 : index
    %c0_37 = arith.constant 0 : index
    %56 = vector.load %arg9[%c0_36, %c0_37] : memref<1x128xf32, #tpu.memory_space<vmem>>, vector<1x128xf32>
    %57 = vector.broadcast %56 : vector<1x128xf32> to vector<8x128xf32>
    %58 = arith.addf %55, %57 : vector<8x128xf32>
    %59 = arith.truncf %58 : vector<8x128xf32> to vector<8x128xbf16>
    %c0_38 = arith.constant 0 : index
    %c0_39 = arith.constant 0 : index
    %60 = vector.load %arg10[%c0_38, %c0_39] : memref<8x128xbf16, #tpu.memory_space<vmem>>, vector<8x128xbf16>
    tpu.vector_store %arg10[%c0_38, %c0_39], %59 {strides = array<i32>} : memref<8x128xbf16, #tpu.memory_space<vmem>>, vector<8x128xbf16>,
    return
  }
  func.func @transform_0(%arg0: i32) -> (i32, i32) {
    %c0_i32 = arith.constant 0 : i32
    %c0_i32_0 = arith.constant 0 : i32
    return %arg0, %c0_i32 : i32, i32
  }
  func.func @transform_1(%arg0: i32) -> (i32, i32) {
    %c0_i32 = arith.constant 0 : i32
    %c0_i32_0 = arith.constant 0 : i32
    %c0_i32_1 = arith.constant 0 : i32
    return %c0_i32, %c0_i32_0 : i32, i32
  }
  func.func @transform_2(%arg0: i32) -> (i32, i32) {
    %c0_i32 = arith.constant 0 : i32
    %c0_i32_0 = arith.constant 0 : i32
    %c0_i32_1 = arith.constant 0 : i32
    return %c0_i32, %c0_i32_0 : i32, i32
  }
  func.func @transform_3(%arg0: i32) -> (i32, i32) {
    %c0_i32 = arith.constant 0 : i32
    %c0_i32_0 = arith.constant 0 : i32
    %c0_i32_1 = arith.constant 0 : i32
    return %c0_i32, %c0_i32_0 : i32, i32
  }
  func.func @transform_4(%arg0: i32) -> (i32, i32) {
    %c0_i32 = arith.constant 0 : i32
    %c0_i32_0 = arith.constant 0 : i32
    %c0_i32_1 = arith.constant 0 : i32
    return %c0_i32, %c0_i32_0 : i32, i32
  }
  func.func @transform_5(%arg0: i32) -> (i32, i32) {
    %c0_i32 = arith.constant 0 : i32
    %c0_i32_0 = arith.constant 0 : i32
    %c0_i32_1 = arith.constant 0 : i32
    return %c0_i32, %c0_i32_0 : i32, i32
  }
  func.func @transform_6(%arg0: i32) -> (i32, i32) {
    %c0_i32 = arith.constant 0 : i32
    %c0_i32_0 = arith.constant 0 : i32
    %c0_i32_1 = arith.constant 0 : i32
    return %c0_i32, %c0_i32_0 : i32, i32
  }
  func.func @transform_7(%arg0: i32) -> (i32, i32) {
    %c0_i32 = arith.constant 0 : i32
    %c0_i32_0 = arith.constant 0 : i32
    %c0_i32_1 = arith.constant 0 : i32
    return %c0_i32, %c0_i32_0 : i32, i32
  }
  func.func @transform_8(%arg0: i32) -> (i32, i32) {
    %c0_i32 = arith.constant 0 : i32
    %c0_i32_0 = arith.constant 0 : i32
    %c0_i32_1 = arith.constant 0 : i32
    return %c0_i32, %c0_i32_0 : i32, i32
  }
  func.func @transform_9(%arg0: i32) -> (i32, i32) {
    %c0_i32 = arith.constant 0 : i32
    %c0_i32_0 = arith.constant 0 : i32
    return %arg0, %c0_i32 : i32, i32
  }
}

</mosaic_0001>

<llo_original>
// kernel: tpu_custom_call.1
$region0: #{tpu_custom_call.1}
  #allocation0 [shape = 'u32[]', space=smem, size = 0x4, offset = 0x4, fixed_abs, tag = 'smem constant byte address 0x4 - core index']
  #allocation1 [shape = 'u32[144,128]{1,0:T(1,128)}', space=vmem, size = 0x12000, scoped, tag = 'internal scratch']
  #allocation2 [shape = 'bf16[8,128]{1,0:T(8,128)(2,1)}', space=vmem, size = 0x800, scoped, tag = 'scratch operand']
  %s0 = inlined_call_operand.hbm [shape: f32[8,90], index: 0, kind: input, shape index: {}]
  %s1 = inlined_call_operand.hbm [shape: bf16[128,128], index: 1, kind: input, shape index: {}]
  %s2 = inlined_call_operand.vmem [shape: f32[1,128], index: 2, kind: input, shape index: {}]
  %s3 = inlined_call_operand.hbm [shape: bf16[128,128], index: 3, kind: input, shape index: {}]
  %s4 = inlined_call_operand.vmem [shape: f32[1,128], index: 4, kind: input, shape index: {}]
  %s5 = inlined_call_operand.hbm [shape: bf16[128,128], index: 5, kind: input, shape index: {}]
  %s6 = inlined_call_operand.vmem [shape: f32[1,128], index: 6, kind: input, shape index: {}]
  %s7 = inlined_call_operand.hbm [shape: bf16[128,128], index: 7, kind: input, shape index: {}]
  %s8 = inlined_call_operand.vmem [shape: f32[1,128], index: 8, kind: input, shape index: {}]
  %s9 = inlined_call_operand.hbm [shape: bf16[8,128], index: 9, kind: output, shape index: {}]
  %s10 = sld [smem:[#allocation0]]
  $region66: #{tpu_custom_call.1} parent=0
    _
  %s12 = ssub.s32 1, %s10
  %s13 = scalar_select 0, %s12, %s10
  $region1: #{tpu_custom_call.1} parent=0
    #allocation3 [shape = 'u8[4096]{0}', space=vmem, size = 0x1000, scoped, tag = 'input window, operand 0, single buffered']
    #allocation4 [shape = 's32[1]{0}', space=sflag, size = 0x4, scoped, tag = 'scoped memory for tpu_custom_call.1']
    #allocation5 [shape = 's32[1]{0}', space=sflag, size = 0x4, scoped, tag = 'scoped memory for tpu_custom_call.1']
    #allocation6 [shape = 'u8[32768]{0}', space=vmem, size = 0x8000, scoped, tag = 'input window, operand 1, single buffered']
    #allocation7 [shape = 's32[1]{0}', space=sflag, size = 0x4, scoped, tag = 'scoped memory for tpu_custom_call.1']
    #allocation8 [shape = 'u8[32768]{0}', space=vmem, size = 0x8000, scoped, tag = 'input window, operand 3, single buffered']
    #allocation9 [shape = 'u8[32768]{0}', space=vmem, size = 0x8000, scoped, tag = 'input window, operand 5, single buffered']
    #allocation10 [shape = 's32[1]{0}', space=sflag, size = 0x4, scoped, tag = 'scoped memory for tpu_custom_call.1']
    #allocation11 [shape = 'u8[32768]{0}', space=vmem, size = 0x8000, scoped, tag = 'input window, operand 7, single buffered']
    #allocation12 [shape = 'u8[2048]{0}', space=vmem, size = 0x800, scoped, tag = 'output window, operand 0, single buffered']
    %14 = vsyncpa [#allocation4], 0
    %15 = vsyncpa [#allocation7], 0
    %16 = vsyncpa [#allocation10], 0
    %17 = vsyncpa [#allocation5], 0
    // Predicated region
    $region2: #{tpu_custom_call.1} parent=1 // pred_check
      _
    $region3: #{tpu_custom_call.1} parent=1 // pred_check_branch
      %19 = sbr.rel (0) target = $region5
    $region4: #{tpu_custom_call.1} parent=1 // pred_region
      %s21 = ssub.s32 128, 128
      %22 = vsyncadd [#allocation4], %s21
      %s24 = sshll.u32 [#allocation3], 4
      %s25 = int_to_ptr.vmem [resolvable:$true] %s24
      %27 = dma.hbm_to_vmem [thread:$0]  %s0, 128, %s25, [#allocation4]
    $region5: #{tpu_custom_call.1} parent=1 // pred_fallthru
      _
    // Predicated region
    $region6: #{tpu_custom_call.1} parent=1 // pred_check
      _
    $region7: #{tpu_custom_call.1} parent=1 // pred_check_branch
      %29 = sbr.rel (0) target = $region9
    $region8: #{tpu_custom_call.1} parent=1 // pred_region
      %s31 = ssub.s32 1024, 1024
      %32 = vsyncadd [#allocation7], %s31
      %s33 = sshll.u32 [#allocation6], 4
      %s34 = int_to_ptr.vmem [resolvable:$true] %s33
      %39 = dma.hbm_to_vmem [thread:$0]  %s1, 1024, %s34, [#allocation7], 64, 64, 4
    $region9: #{tpu_custom_call.1} parent=1 // pred_fallthru
      _
    // Predicated region
    $region10: #{tpu_custom_call.1} parent=1 // pred_check
      _
    $region11: #{tpu_custom_call.1} parent=1 // pred_check_branch
      %41 = sbr.rel (0) target = $region13
    $region12: #{tpu_custom_call.1} parent=1 // pred_region
      _
    $region13: #{tpu_custom_call.1} parent=1 // pred_fallthru
      _
    // Predicated region
    $region14: #{tpu_custom_call.1} parent=1 // pred_check
      _
    $region15: #{tpu_custom_call.1} parent=1 // pred_check_branch
      %43 = sbr.rel (0) target = $region17
    $region16: #{tpu_custom_call.1} parent=1 // pred_region
      %s45 = ssub.s32 1024, 1024
      %46 = vsyncadd [#allocation7], %s45
      %s47 = sshll.u32 [#allocation8], 4
      %s48 = int_to_ptr.vmem [resolvable:$true] %s47
      %53 = dma.hbm_to_vmem [thread:$0]  %s3, 1024, %s48, [#allocation7], 64, 64, 4
    $region17: #{tpu_custom_call.1} parent=1 // pred_fallthru
      _
    // Predicated region
    $region18: #{tpu_custom_call.1} parent=1 // pred_check
      _
    $region19: #{tpu_custom_call.1} parent=1 // pred_check_branch
      %55 = sbr.rel (0) target = $region21
    $region20: #{tpu_custom_call.1} parent=1 // pred_region
      _
    $region21: #{tpu_custom_call.1} parent=1 // pred_fallthru
      _
    // Predicated region
    $region22: #{tpu_custom_call.1} parent=1 // pred_check
      _
    $region23: #{tpu_custom_call.1} parent=1 // pred_check_branch
      %57 = sbr.rel (0) target = $region25
    $region24: #{tpu_custom_call.1} parent=1 // pred_region
      %s59 = ssub.s32 1024, 1024
      %60 = vsyncadd [#allocation10], %s59
      %s61 = sshll.u32 [#allocation9], 4
      %s62 = int_to_ptr.vmem [resolvable:$true] %s61
      %67 = dma.hbm_to_vmem [thread:$0]  %s5, 1024, %s62, [#allocation10], 64, 64, 4
    $region25: #{tpu_custom_call.1} parent=1 // pred_fallthru
      _
    // Predicated region
    $region26: #{tpu_custom_call.1} parent=1 // pred_check
      _
    $region27: #{tpu_custom_call.1} parent=1 // pred_check_branch
      %69 = sbr.rel (0) target = $region29
    $region28: #{tpu_custom_call.1} parent=1 // pred_region
      _
    $region29: #{tpu_custom_call.1} parent=1 // pred_fallthru
      _
    // Predicated region
    $region30: #{tpu_custom_call.1} parent=1 // pred_check
      _
    $region31: #{tpu_custom_call.1} parent=1 // pred_check_branch
      %71 = sbr.rel (0) target = $region33
    $region32: #{tpu_custom_call.1} parent=1 // pred_region
      %s73 = ssub.s32 1024, 1024
      %74 = vsyncadd [#allocation10], %s73
      %s75 = sshll.u32 [#allocation11], 4
      %s76 = int_to_ptr.vmem [resolvable:$true] %s75
      %81 = dma.hbm_to_vmem [thread:$0]  %s7, 1024, %s76, [#allocation10], 64, 64, 4
    $region33: #{tpu_custom_call.1} parent=1 // pred_fallthru
      _
    // Predicated region
    $region34: #{tpu_custom_call.1} parent=1 // pred_check
      _
    $region35: #{tpu_custom_call.1} parent=1 // pred_check_branch
      %83 = sbr.rel (0) target = $region37
    $region36: #{tpu_custom_call.1} parent=1 // pred_region
      _
    $region37: #{tpu_custom_call.1} parent=1 // pred_fallthru
      _
    // Predicated region
    $region38: #{tpu_custom_call.1} parent=1 // pred_check
      _
    $region39: #{tpu_custom_call.1} parent=1 // pred_check_branch
      %85 = sbr.rel (0) target = $region41
    $region40: #{tpu_custom_call.1} parent=1 // pred_region
      %86 = dma.done [#allocation4], 128
    $region41: #{tpu_custom_call.1} parent=1 // pred_fallthru
      _
    // Predicated region
    $region42: #{tpu_custom_call.1} parent=1 // pred_check
      _
    $region43: #{tpu_custom_call.1} parent=1 // pred_check_branch
      %88 = sbr.rel (0) target = $region45
    $region44: #{tpu_custom_call.1} parent=1 // pred_region
      %89 = dma.done [#allocation7], 1024
    $region45: #{tpu_custom_call.1} parent=1 // pred_fallthru
      _
    // Predicated region
    $region46: #{tpu_custom_call.1} parent=1 // pred_check
      _
    $region47: #{tpu_custom_call.1} parent=1 // pred_check_branch
      %91 = sbr.rel (0) target = $region49
    $region48: #{tpu_custom_call.1} parent=1 // pred_region
      %92 = dma.done [#allocation7], 1024
    $region49: #{tpu_custom_call.1} parent=1 // pred_fallthru
      _
    // Predicated region
    $region50: #{tpu_custom_call.1} parent=1 // pred_check
      _
    $region51: #{tpu_custom_call.1} parent=1 // pred_check_branch
      %94 = sbr.rel (0) target = $region53
    $region52: #{tpu_custom_call.1} parent=1 // pred_region
      %95 = dma.done [#allocation10], 1024
    $region53: #{tpu_custom_call.1} parent=1 // pred_fallthru
      _
    // Predicated region
    $region54: #{tpu_custom_call.1} parent=1 // pred_check
      _
    $region55: #{tpu_custom_call.1} parent=1 // pred_check_branch
      %97 = sbr.rel (0) target = $region57
    $region56: #{tpu_custom_call.1} parent=1 // pred_region
      %98 = dma.done [#allocation10], 1024
    $region57: #{tpu_custom_call.1} parent=1 // pred_fallthru
      _
    %v100 = vld [vmem:[#allocation3] sm:$0xff]
    %v101 = vpack.c.bf16 %v100, %v100
    %vm102 = vcmask 732160
    %103 = vst.msk [vmem:[#allocation2] sm:$0xf] %vm102, %v101
    %vm104 = vcmask 1044176
    %105 = vst.msk [vmem:[#allocation2] sm:$0xf] %vm104, 0
    %v106 = vld [vmem:[#allocation2] sm:$0xf]
    %v107 = vld [vmem:[#allocation6] sm:$0xf]
    %v108 = vld [vmem:[#allocation6 + $0x4] sm:$0xf]
    %v109 = vld [vmem:[#allocation6 + $0x8] sm:$0xf]
    %v110 = vld [vmem:[#allocation6 + $0xc] sm:$0xf]
    %v111 = vld [vmem:[#allocation6 + $0x10] sm:$0xf]
    %v112 = vld [vmem:[#allocation6 + $0x14] sm:$0xf]
    %v113 = vld [vmem:[#allocation6 + $0x18] sm:$0xf]
    %v114 = vld [vmem:[#allocation6 + $0x1c] sm:$0xf]
    %v115 = vld [vmem:[#allocation6 + $0x20] sm:$0xf]
    %v116 = vld [vmem:[#allocation6 + $0x24] sm:$0xf]
    %v117 = vld [vmem:[#allocation6 + $0x28] sm:$0xf]
    %v118 = vld [vmem:[#allocation6 + $0x2c] sm:$0xf]
    %v119 = vld [vmem:[#allocation6 + $0x30] sm:$0xf]
    %v120 = vld [vmem:[#allocation6 + $0x34] sm:$0xf]
    %v121 = vld [vmem:[#allocation6 + $0x38] sm:$0xf]
    %v122 = vld [vmem:[#allocation6 + $0x3c] sm:$0xf]
    %v123 = vld [vmem:[%s2] sm:$0x1]
    %v125 = vlaneseq
    %v126 = vshrl.u32 %v125, 7
    %v127 = vsub.s32 0, %v126
    %v128 = vrot.slane %v123, %v127
    %v146 = vunpack.c.l.b16 %v107
    %v147 = vunpack.c.l.b16 %v108
    %v148 = vunpack.c.l.b16 %v109
    %v149 = vunpack.c.l.b16 %v110
    %v150 = vunpack.c.l.b16 %v111
    %v151 = vunpack.c.l.b16 %v112
    %v152 = vunpack.c.l.b16 %v113
    %v153 = vunpack.c.l.b16 %v114
    %v154 = vunpack.c.l.b16 %v115
    %v155 = vunpack.c.l.b16 %v116
    %v156 = vunpack.c.l.b16 %v117
    %v157 = vunpack.c.l.b16 %v118
    %v158 = vunpack.c.l.b16 %v119
    %v159 = vunpack.c.l.b16 %v120
    %v160 = vunpack.c.l.b16 %v121
    %v161 = vunpack.c.l.b16 %v122
    %v162 = vpack.c.b16 %v147, %v146
    %v163 = vpack.c.b16 %v149, %v148
    %v164 = vpack.c.b16 %v151, %v150
    %v165 = vpack.c.b16 %v153, %v152
    %v166 = vpack.c.b16 %v155, %v154
    %v167 = vpack.c.b16 %v157, %v156
    %v168 = vpack.c.b16 %v159, %v158
    %v169 = vpack.c.b16 %v161, %v160
    %178 = vmatprep.subr.bf16.mxu0 0
    %179 = vmatpush1.bf16.msra.mxu0 %v162
    %180 = vmatprep.subr.bf16.mxu0 0
    %181 = vmatpush1.bf16.msra.mxu0 %v163
    %182 = vmatprep.subr.bf16.mxu0 0
    %183 = vmatpush1.bf16.msra.mxu0 %v164
    %184 = vmatprep.subr.bf16.mxu0 0
    %185 = vmatpush1.bf16.msra.mxu0 %v165
    %186 = vmatprep.subr.bf16.mxu0 0
    %187 = vmatpush1.bf16.msra.mxu0 %v166
    %188 = vmatprep.subr.bf16.mxu0 0
    %189 = vmatpush1.bf16.msra.mxu0 %v167
    %190 = vmatprep.subr.bf16.mxu0 0
    %191 = vmatpush1.bf16.msra.mxu0 %v168
    %192 = vmatprep.subr.bf16.mxu0 0
    %193 = vmatpush1.bf16.msra.mxu0 %v169
    %194 = vmatprep.subr.bf16.mxu0 0
    %195 = vmatpush1.bf16.msra.mxu0 0
    %196 = vmatprep.subr.bf16.mxu0 0
    %197 = vmatpush1.bf16.msra.mxu0 0
    %198 = vmatprep.subr.bf16.mxu0 0
    %199 = vmatpush1.bf16.msra.mxu0 0
    %200 = vmatprep.subr.bf16.mxu0 0
    %201 = vmatpush1.bf16.msra.mxu0 0
    %202 = vmatprep.subr.bf16.mxu0 0
    %203 = vmatpush1.bf16.msra.mxu0 0
    %204 = vmatprep.subr.bf16.mxu0 0
    %205 = vmatpush1.bf16.msra.mxu0 0
    %206 = vmatprep.subr.bf16.mxu0 0
    %207 = vmatpush1.bf16.msra.mxu0 0
    %208 = vmatprep.subr.bf16.mxu0 0
    %209 = vmatpush1.bf16.msra.mxu0 0
    %210 = vmatprep.mubr.bf16.mxu0 0
    %211 = vmatmul.mubr.bf16.gmra.mrb[0].mxu0 %v106
    %v212 = vpop.f32.mrb[0].mxu0
    %v213 = vadd.f32 %v128, %v212
    %v214 = vpop.f32.mrb[0].mxu0
    %v215 = vpop.f32.mrb[0].mxu0
    %v216 = vpop.f32.mrb[0].mxu0
    %217 = vdwg.mxu0
    %vm218 = vcmp.gt.f32.partialorder %v213, 0.0
    %v219 = vmul.f32 %v213, 1.442695
    %v220 = vpow.pop %v219
    %v221 = vsub.f32 %v220, 1.0
    %v222 = vmul.f32 %v221, 1.6732632
    %v223 = vsel %vm218, %v213, %v222
    %v224 = vmul.f32 %v223, 1.050701
    %v225 = vpack.c.bf16 %v224, %v224
    %v226 = vld [vmem:[#allocation8] sm:$0xf]
    %v227 = vld [vmem:[#allocation8 + $0x4] sm:$0xf]
    %v228 = vld [vmem:[#allocation8 + $0x8] sm:$0xf]
    %v229 = vld [vmem:[#allocation8 + $0xc] sm:$0xf]
    %v230 = vld [vmem:[#allocation8 + $0x10] sm:$0xf]
    %v231 = vld [vmem:[#allocation8 + $0x14] sm:$0xf]
    %v232 = vld [vmem:[#allocation8 + $0x18] sm:$0xf]
    %v233 = vld [vmem:[#allocation8 + $0x1c] sm:$0xf]
    %v234 = vld [vmem:[#allocation8 + $0x20] sm:$0xf]
    %v235 = vld [vmem:[#allocation8 + $0x24] sm:$0xf]
    %v236 = vld [vmem:[#allocation8 + $0x28] sm:$0xf]
    %v237 = vld [vmem:[#allocation8 + $0x2c] sm:$0xf]
    %v238 = vld [vmem:[#allocation8 + $0x30] sm:$0xf]
    %v239 = vld [vmem:[#allocation8 + $0x34] sm:$0xf]
    %v240 = vld [vmem:[#allocation8 + $0x38] sm:$0xf]
    %v241 = vld [vmem:[#allocation8 + $0x3c] sm:$0xf]
    %v242 = vld [vmem:[%s4] sm:$0x1]
    %v244 = vlaneseq
    %v245 = vshrl.u32 %v244, 7
    %v246 = vsub.s32 0, %v245
    %v247 = vrot.slane %v242, %v246
    %v265 = vunpack.c.l.b16 %v226
    %v266 = vunpack.c.l.b16 %v227
    %v267 = vunpack.c.l.b16 %v228
    %v268 = vunpack.c.l.b16 %v229
    %v269 = vunpack.c.l.b16 %v230
    %v270 = vunpack.c.l.b16 %v231
    %v271 = vunpack.c.l.b16 %v232
    %v272 = vunpack.c.l.b16 %v233
    %v273 = vunpack.c.l.b16 %v234
    %v274 = vunpack.c.l.b16 %v235
    %v275 = vunpack.c.l.b16 %v236
    %v276 = vunpack.c.l.b16 %v237
    %v277 = vunpack.c.l.b16 %v238
    %v278 = vunpack.c.l.b16 %v239
    %v279 = vunpack.c.l.b16 %v240
    %v280 = vunpack.c.l.b16 %v241
    %v281 = vpack.c.b16 %v266, %v265
    %v282 = vpack.c.b16 %v268, %v267
    %v283 = vpack.c.b16 %v270, %v269
    %v284 = vpack.c.b16 %v272, %v271
    %v285 = vpack.c.b16 %v274, %v273
    %v286 = vpack.c.b16 %v276, %v275
    %v287 = vpack.c.b16 %v278, %v277
    %v288 = vpack.c.b16 %v280, %v279
    %297 = vmatprep.subr.bf16.mxu0 0
    %298 = vmatpush1.bf16.msra.mxu0 %v281
    %299 = vmatprep.subr.bf16.mxu0 0
    %300 = vmatpush1.bf16.msra.mxu0 %v282
    %301 = vmatprep.subr.bf16.mxu0 0
    %302 = vmatpush1.bf16.msra.mxu0 %v283
    %303 = vmatprep.subr.bf16.mxu0 0
    %304 = vmatpush1.bf16.msra.mxu0 %v284
    %305 = vmatprep.subr.bf16.mxu0 0
    %306 = vmatpush1.bf16.msra.mxu0 %v285
    %307 = vmatprep.subr.bf16.mxu0 0
    %308 = vmatpush1.bf16.msra.mxu0 %v286
    %309 = vmatprep.subr.bf16.mxu0 0
    %310 = vmatpush1.bf16.msra.mxu0 %v287
    %311 = vmatprep.subr.bf16.mxu0 0
    %312 = vmatpush1.bf16.msra.mxu0 %v288
    %313 = vmatprep.subr.bf16.mxu0 0
    %314 = vmatpush1.bf16.msra.mxu0 0
    %315 = vmatprep.subr.bf16.mxu0 0
    %316 = vmatpush1.bf16.msra.mxu0 0
    %317 = vmatprep.subr.bf16.mxu0 0
    %318 = vmatpush1.bf16.msra.mxu0 0
    %319 = vmatprep.subr.bf16.mxu0 0
    %320 = vmatpush1.bf16.msra.mxu0 0
    %321 = vmatprep.subr.bf16.mxu0 0
    %322 = vmatpush1.bf16.msra.mxu0 0
    %323 = vmatprep.subr.bf16.mxu0 0
    %324 = vmatpush1.bf16.msra.mxu0 0
    %325 = vmatprep.subr.bf16.mxu0 0
    %326 = vmatpush1.bf16.msra.mxu0 0
    %327 = vmatprep.subr.bf16.mxu0 0
    %328 = vmatpush1.bf16.msra.mxu0 0
    %329 = vmatprep.mubr.bf16.mxu0 0
    %330 = vmatmul.mubr.bf16.gmra.mrb[0].mxu0 %v225
    %v331 = vpop.f32.mrb[0].mxu0
    %v332 = vadd.f32 %v247, %v331
    %v333 = vpop.f32.mrb[0].mxu0
    %v334 = vpop.f32.mrb[0].mxu0
    %v335 = vpop.f32.mrb[0].mxu0
    %336 = vdwg.mxu0
    %vm337 = vcmp.gt.f32.partialorder %v332, 0.0
    %v338 = vmul.f32 %v332, 1.442695
    %v339 = vpow.pop %v338
    %v340 = vsub.f32 %v339, 1.0
    %v341 = vmul.f32 %v340, 1.6732632
    %v342 = vsel %vm337, %v332, %v341
    %v343 = vmul.f32 %v342, 1.050701
    %v344 = vpack.c.bf16 %v343, %v343
    %v345 = vld [vmem:[#allocation9] sm:$0xf]
    %v346 = vld [vmem:[#allocation9 + $0x4] sm:$0xf]
    %v347 = vld [vmem:[#allocation9 + $0x8] sm:$0xf]
    %v348 = vld [vmem:[#allocation9 + $0xc] sm:$0xf]
    %v349 = vld [vmem:[#allocation9 + $0x10] sm:$0xf]
    %v350 = vld [vmem:[#allocation9 + $0x14] sm:$0xf]
    %v351 = vld [vmem:[#allocation9 + $0x18] sm:$0xf]
    %v352 = vld [vmem:[#allocation9 + $0x1c] sm:$0xf]
    %v353 = vld [vmem:[#allocation9 + $0x20] sm:$0xf]
    %v354 = vld [vmem:[#allocation9 + $0x24] sm:$0xf]
    %v355 = vld [vmem:[#allocation9 + $0x28] sm:$0xf]
    %v356 = vld [vmem:[#allocation9 + $0x2c] sm:$0xf]
    %v357 = vld [vmem:[#allocation9 + $0x30] sm:$0xf]
    %v358 = vld [vmem:[#allocation9 + $0x34] sm:$0xf]
    %v359 = vld [vmem:[#allocation9 + $0x38] sm:$0xf]
    %v360 = vld [vmem:[#allocation9 + $0x3c] sm:$0xf]
    %v361 = vld [vmem:[%s6] sm:$0x1]
    %v363 = vlaneseq
    %v364 = vshrl.u32 %v363, 7
    %v365 = vsub.s32 0, %v364
    %v366 = vrot.slane %v361, %v365
    %v384 = vunpack.c.l.b16 %v345
    %v385 = vunpack.c.l.b16 %v346
    %v386 = vunpack.c.l.b16 %v347
    %v387 = vunpack.c.l.b16 %v348
    %v388 = vunpack.c.l.b16 %v349
    %v389 = vunpack.c.l.b16 %v350
    %v390 = vunpack.c.l.b16 %v351
    %v391 = vunpack.c.l.b16 %v352
    %v392 = vunpack.c.l.b16 %v353
    %v393 = vunpack.c.l.b16 %v354
    %v394 = vunpack.c.l.b16 %v355
    %v395 = vunpack.c.l.b16 %v356
    %v396 = vunpack.c.l.b16 %v357
    %v397 = vunpack.c.l.b16 %v358
    %v398 = vunpack.c.l.b16 %v359
    %v399 = vunpack.c.l.b16 %v360
    %v400 = vpack.c.b16 %v385, %v384
    %v401 = vpack.c.b16 %v387, %v386
    %v402 = vpack.c.b16 %v389, %v388
    %v403 = vpack.c.b16 %v391, %v390
    %v404 = vpack.c.b16 %v393, %v392
    %v405 = vpack.c.b16 %v395, %v394
    %v406 = vpack.c.b16 %v397, %v396
    %v407 = vpack.c.b16 %v399, %v398
    %416 = vmatprep.subr.bf16.mxu0 0
    %417 = vmatpush1.bf16.msra.mxu0 %v400
    %418 = vmatprep.subr.bf16.mxu0 0
    %419 = vmatpush1.bf16.msra.mxu0 %v401
    %420 = vmatprep.subr.bf16.mxu0 0
    %421 = vmatpush1.bf16.msra.mxu0 %v402
    %422 = vmatprep.subr.bf16.mxu0 0
    %423 = vmatpush1.bf16.msra.mxu0 %v403
    %424 = vmatprep.subr.bf16.mxu0 0
    %425 = vmatpush1.bf16.msra.mxu0 %v404
    %426 = vmatprep.subr.bf16.mxu0 0
    %427 = vmatpush1.bf16.msra.mxu0 %v405
    %428 = vmatprep.subr.bf16.mxu0 0
    %429 = vmatpush1.bf16.msra.mxu0 %v406
    %430 = vmatprep.subr.bf16.mxu0 0
    %431 = vmatpush1.bf16.msra.mxu0 %v407
    %432 = vmatprep.subr.bf16.mxu0 0
    %433 = vmatpush1.bf16.msra.mxu0 0
    %434 = vmatprep.subr.bf16.mxu0 0
    %435 = vmatpush1.bf16.msra.mxu0 0
    %436 = vmatprep.subr.bf16.mxu0 0
    %437 = vmatpush1.bf16.msra.mxu0 0
    %438 = vmatprep.subr.bf16.mxu0 0
    %439 = vmatpush1.bf16.msra.mxu0 0
    %440 = vmatprep.subr.bf16.mxu0 0
    %441 = vmatpush1.bf16.msra.mxu0 0
    %442 = vmatprep.subr.bf16.mxu0 0
    %443 = vmatpush1.bf16.msra.mxu0 0
    %444 = vmatprep.subr.bf16.mxu0 0
    %445 = vmatpush1.bf16.msra.mxu0 0
    %446 = vmatprep.subr.bf16.mxu0 0
    %447 = vmatpush1.bf16.msra.mxu0 0
    %448 = vmatprep.mubr.bf16.mxu0 0
    %449 = vmatmul.mubr.bf16.gmra.mrb[0].mxu0 %v344
    %v450 = vpop.f32.mrb[0].mxu0
    %v451 = vadd.f32 %v366, %v450
    %v452 = vpop.f32.mrb[0].mxu0
    %v453 = vpop.f32.mrb[0].mxu0
    %v454 = vpop.f32.mrb[0].mxu0
    %455 = vdwg.mxu0
    %vm456 = vcmp.gt.f32.partialorder %v451, 0.0
    %v457 = vmul.f32 %v451, 1.442695
    %v458 = vpow.pop %v457
    %v459 = vsub.f32 %v458, 1.0
    %v460 = vmul.f32 %v459, 1.6732632
    %v461 = vsel %vm456, %v451, %v460
    %v462 = vmul.f32 %v461, 1.050701
    %v463 = vpack.c.bf16 %v462, %v462
    %v464 = vld [vmem:[#allocation11] sm:$0xf]
    %v465 = vld [vmem:[#allocation11 + $0x4] sm:$0xf]
    %v466 = vld [vmem:[#allocation11 + $0x8] sm:$0xf]
    %v467 = vld [vmem:[#allocation11 + $0xc] sm:$0xf]
    %v468 = vld [vmem:[#allocation11 + $0x10] sm:$0xf]
    %v469 = vld [vmem:[#allocation11 + $0x14] sm:$0xf]
    %v470 = vld [vmem:[#allocation11 + $0x18] sm:$0xf]
    %v471 = vld [vmem:[#allocation11 + $0x1c] sm:$0xf]
    %v472 = vld [vmem:[#allocation11 + $0x20] sm:$0xf]
    %v473 = vld [vmem:[#allocation11 + $0x24] sm:$0xf]
    %v474 = vld [vmem:[#allocation11 + $0x28] sm:$0xf]
    %v475 = vld [vmem:[#allocation11 + $0x2c] sm:$0xf]
    %v476 = vld [vmem:[#allocation11 + $0x30] sm:$0xf]
    %v477 = vld [vmem:[#allocation11 + $0x34] sm:$0xf]
    %v478 = vld [vmem:[#allocation11 + $0x38] sm:$0xf]
    %v479 = vld [vmem:[#allocation11 + $0x3c] sm:$0xf]
    %v480 = vld [vmem:[%s8] sm:$0x1]
    %v482 = vlaneseq
    %v483 = vshrl.u32 %v482, 7
    %v484 = vsub.s32 0, %v483
    %v485 = vrot.slane %v480, %v484
    %v503 = vunpack.c.l.b16 %v464
    %v504 = vunpack.c.l.b16 %v465
    %v505 = vunpack.c.l.b16 %v466
    %v506 = vunpack.c.l.b16 %v467
    %v507 = vunpack.c.l.b16 %v468
    %v508 = vunpack.c.l.b16 %v469
    %v509 = vunpack.c.l.b16 %v470
    %v510 = vunpack.c.l.b16 %v471
    %v511 = vunpack.c.l.b16 %v472
    %v512 = vunpack.c.l.b16 %v473
    %v513 = vunpack.c.l.b16 %v474
    %v514 = vunpack.c.l.b16 %v475
    %v515 = vunpack.c.l.b16 %v476
    %v516 = vunpack.c.l.b16 %v477
    %v517 = vunpack.c.l.b16 %v478
    %v518 = vunpack.c.l.b16 %v479
    %v519 = vpack.c.b16 %v504, %v503
    %v520 = vpack.c.b16 %v506, %v505
    %v521 = vpack.c.b16 %v508, %v507
    %v522 = vpack.c.b16 %v510, %v509
    %v523 = vpack.c.b16 %v512, %v511
    %v524 = vpack.c.b16 %v514, %v513
    %v525 = vpack.c.b16 %v516, %v515
    %v526 = vpack.c.b16 %v518, %v517
    %535 = vmatprep.subr.bf16.mxu0 0
    %536 = vmatpush1.bf16.msra.mxu0 %v519
    %537 = vmatprep.subr.bf16.mxu0 0
    %538 = vmatpush1.bf16.msra.mxu0 %v520
    %539 = vmatprep.subr.bf16.mxu0 0
    %540 = vmatpush1.bf16.msra.mxu0 %v521
    %541 = vmatprep.subr.bf16.mxu0 0
    %542 = vmatpush1.bf16.msra.mxu0 %v522
    %543 = vmatprep.subr.bf16.mxu0 0
    %544 = vmatpush1.bf16.msra.mxu0 %v523
    %545 = vmatprep.subr.bf16.mxu0 0
    %546 = vmatpush1.bf16.msra.mxu0 %v524
    %547 = vmatprep.subr.bf16.mxu0 0
    %548 = vmatpush1.bf16.msra.mxu0 %v525
    %549 = vmatprep.subr.bf16.mxu0 0
    %550 = vmatpush1.bf16.msra.mxu0 %v526
    %551 = vmatprep.subr.bf16.mxu0 0
    %552 = vmatpush1.bf16.msra.mxu0 0
    %553 = vmatprep.subr.bf16.mxu0 0
    %554 = vmatpush1.bf16.msra.mxu0 0
    %555 = vmatprep.subr.bf16.mxu0 0
    %556 = vmatpush1.bf16.msra.mxu0 0
    %557 = vmatprep.subr.bf16.mxu0 0
    %558 = vmatpush1.bf16.msra.mxu0 0
    %559 = vmatprep.subr.bf16.mxu0 0
    %560 = vmatpush1.bf16.msra.mxu0 0
    %561 = vmatprep.subr.bf16.mxu0 0
    %562 = vmatpush1.bf16.msra.mxu0 0
    %563 = vmatprep.subr.bf16.mxu0 0
    %564 = vmatpush1.bf16.msra.mxu0 0
    %565 = vmatprep.subr.bf16.mxu0 0
    %566 = vmatpush1.bf16.msra.mxu0 0
    %567 = vmatprep.mubr.bf16.mxu0 0
    %568 = vmatmul.mubr.bf16.gmra.mrb[0].mxu0 %v463
    %v569 = vpop.f32.mrb[0].mxu0
    %v570 = vadd.f32 %v485, %v569
    %v571 = vpop.f32.mrb[0].mxu0
    %v572 = vpop.f32.mrb[0].mxu0
    %v573 = vpop.f32.mrb[0].mxu0
    %574 = vdwg.mxu0
    %v575 = vpack.c.bf16 %v570, %v570
    %576 = vst [vmem:[#allocation12] sm:$0xf] %v575
    // Predicated region
    $region58: #{tpu_custom_call.1} parent=1 // pred_check
      _
    $region59: #{tpu_custom_call.1} parent=1 // pred_check_branch
      %578 = sbr.rel (0) target = $region61
    $region60: #{tpu_custom_call.1} parent=1 // pred_region
      %s580 = ssub.s32 64, 64
      %581 = vsyncadd [#allocation5], %s580
      %s583 = sshll.u32 [#allocation12], 4
      %s584 = int_to_ptr.vmem [resolvable:$true] %s583
      %586 = dma.vmem_to_hbm [thread:$0]  %s584, 64, %s9, [#allocation5]
    $region61: #{tpu_custom_call.1} parent=1 // pred_fallthru
      _
    // Predicated region
    $region62: #{tpu_custom_call.1} parent=1 // pred_check
      _
    $region63: #{tpu_custom_call.1} parent=1 // pred_check_branch
      %588 = sbr.rel (0) target = $region65
    $region64: #{tpu_custom_call.1} parent=1 // pred_region
      %589 = dma.done [#allocation5], 64
    $region65: #{tpu_custom_call.1} parent=1 // pred_fallthru
      _
    %590 = vsyncpa [#allocation4], 1
    %591 = vsyncpa [#allocation7], 1
    %592 = vsyncpa [#allocation10], 1
    %593 = vsyncpa [#allocation5], 1

</llo_original>
